<compile_context>
chip_gen: v7x
topology: tpu7x:2x2x1
jax: 0.10.0
libtpu: 0.0.40
codegen_flags: <defaults>
</compile_context>

<pallas_src>
import functools
import math

import jax
import jax.numpy as jnp
from jax import lax
from jax.experimental import pallas as pl
from jax.experimental.pallas import tpu as pltpu


# ---------------------------------------------------------------------------
# Hardware introspection (safe fallbacks everywhere).
# ---------------------------------------------------------------------------

def _device_kind() -> str:
    try:
        return jax.devices()[0].device_kind.lower()
    except Exception:
        return ""


def _vmem_capacity_bytes() -> int:
    try:
        cap = getattr(pltpu.get_tpu_info(), "vmem_capacity_bytes", None)
        if cap:
            return int(min(max(int(cap), 32 * 1024 * 1024), 128 * 1024 * 1024))
    except Exception:
        pass
    kind = _device_kind()
    if "v7" in kind or "tpu7" in kind or "7x" in kind:
        return 64 * 1024 * 1024       # v7x: 64 MiB VMEM / TensorCore
    return 128 * 1024 * 1024          # v5e / v6e: 128 MiB


def _vmem_budget_bytes() -> int:
    # ~25% headroom for compiler-internal scratch: 96 MiB on 128 MiB parts,
    # 48 MiB on v7x.
    return (_vmem_capacity_bytes() * 3) // 4


def _exp_in_bf16_default() -> bool:
    # v6e / v7x have a bf16 EUP path (exp is the binding slot for head dims
    # <=128 once the writeback bound is relieved); v5e and older do not.
    kind = _device_kind()
    return any(tag in kind for tag in ("v6", "v7", "tpu7", "7x"))


# ---------------------------------------------------------------------------
# Tile selection (VMEM-aware).
# ---------------------------------------------------------------------------

_TQ_CANDIDATES = (512, 256, 128, 64, 32, 16, 8)


def _pick_q_tile_attn(lq, lk, d, dv, mxu_itemsize, attn_itemsize, out_itemsize,
                      budget):
    """Largest q tile whose working set fits the per-core VMEM budget."""
    kv_bytes = 2 * lk * (d + dv) * mxu_itemsize          # K/V (double buffered)
    smallest_div = None
    for cand in _TQ_CANDIDATES:
        if lq % cand:
            continue
        smallest_div = cand
        per_tile = (
            2 * cand * lk * 4                   # scores / exp f32 slabs
            + 2 * cand * lk * attn_itemsize     # attn output double buffer
            + 2 * cand * dv * out_itemsize      # out  output double buffer
            + 2 * cand * d * mxu_itemsize       # q input double buffer
        )
        if kv_bytes + per_tile <= budget:
            return cand
    if smallest_div is not None:
        # Even the smallest q tile overflows (very long Lk): callers that can
        # skip attn should use sdpa_no_attn (Lk-tiled online softmax).
        # TODO(synk): Lk-tiled attn-returning path (needs a row-sum sidecar or
        #             a second normalization pass over the stored exp values).
        return smallest_div
    return lq


def _pick_flash_tiles(lq, lk, d, dv, mxu_itemsize, out_itemsize, budget):
    def divisors(n, cands):
        out = [c for c in cands if n % c == 0]
        return out or [n]

    tq_cands = divisors(lq, _TQ_CANDIDATES)
    tk_cands = divisors(lk, (512, 256, 128))
    for tq in tq_cands:
        for tk in tk_cands:
            per = (2 * tq * tk * 4                       # scores / p f32 slabs
                   + tq * (2 + dv) * 4                   # m, l, acc scratch (f32)
                   + 2 * tq * dv * out_itemsize          # out double buffer
                   + 2 * tq * d * mxu_itemsize           # q double buffer
                   + 2 * tk * (d + dv) * mxu_itemsize)   # K/V double buffers
            if per <= budget:
                return tq, tk
    return tq_cands[-1], tk_cands[-1]


def _kv_block_spec(block_shape, index_map, single_buffer):
    """K/V spec; single-buffered when requested (block index constant along the
    inner q-tile axis, so a second buffer is pure VMEM waste)."""
    if single_buffer:
        try:
            return pl.BlockSpec(block_shape, index_map,
                                pipeline_mode=pl.Buffered(1))
        except Exception:   # older jax without pipeline_mode support
            pass
    return pl.BlockSpec(block_shape, index_map)


# ---------------------------------------------------------------------------
# Kernel 1: attention with the full (B, Lq, Lk) attn matrix returned.
# ---------------------------------------------------------------------------

def _sdpa_attn_kernel(q_ref, k_ref, v_ref, out_ref, attn_ref, *, exp_in_bf16):
    # Block views: q (1, TQ, D), k (1, Lk, D), v (1, Lk, Dv).
    # k already carries the 1/temperature factor (folded in f32 in the wrapper).
    q = q_ref[0]
    k = k_ref[0]
    v = v_ref[0]

    # scores = q @ k^T, contracting over D directly (no k-transpose copy),
    # f32 MXU accumulation.
    scores = lax.dot_general(
        q, k,
        dimension_numbers=(((1,), (1,)), ((), ())),
        preferred_element_type=jnp.float32,
    )                                                   # (TQ, Lk) f32

    # Numerically stable softmax over the key axis (dim=2 of the full tensor).
    m = jnp.max(scores, axis=-1, keepdims=True)
    centered = scores - m
    if exp_in_bf16:
        # v6e/v7x: bf16 exp ~doubles EUP throughput; denom still f32.
        e = jnp.exp(centered.astype(jnp.bfloat16)).astype(jnp.float32)
    else:
        e = jnp.exp(centered)
    denom = jnp.sum(e, axis=-1, keepdims=True)
    # Approx EUP reciprocal + one Newton step: ~f32-exact row sums while the
    # divide stays off the VALU.
    inv = pl.reciprocal(denom, approx=True)
    inv = inv * (2.0 - denom * inv)
    attn = e * inv                                      # (TQ, Lk) f32

    # Single low-precision cast, reused for the HBM store and (when dtypes
    # match) the second MXU matmul.
    attn_lowp = attn.astype(attn_ref.dtype)
    attn_ref[0] = attn_lowp
    p = attn_lowp if attn_lowp.dtype == v.dtype else attn.astype(v.dtype)
    out_ref[0] = jnp.dot(
        p, v, preferred_element_type=jnp.float32
    ).astype(out_ref.dtype)


def scaled_dot_product_attention(q, k, v, temperature, mask=None, *,
                                 attn_dtype=jnp.bfloat16,
                                 cast_matmul_to_bf16=False,
                                 exp_in_bf16=None,
                                 block_q=None):
    """Pallas TPU equivalent of ScaledDotProductAttention.forward (eval mode).

    Returns (output (B, Lq, Dv) in q.dtype, attn (B, Lq, Lk) in `attn_dtype`).

    attn_dtype defaults to bf16: the kernel is HBM-write-bound on this tensor,
    so halving its bytes is the single biggest win.  Pass attn_dtype=q.dtype if
    exact-dtype attention probabilities are required.

    cast_matmul_to_bf16: for f32 inputs, run the MXU matmuls in bf16 with f32
    accumulation (3-4x faster MXU rate); softmax stays f32.
    """
    B, Lq, D = q.shape
    Bk, Lk, Dk = k.shape
    Bv, Lkv, Dv = v.shape
    assert D == Dk and Bk == B and Bv == B and Lkv == Lk

    if mask is not None:
        # TODO(synk): optional `mask` (masked_fill with -1e10 before softmax)
        #             not wired in; forward() defaults to mask=None.
        raise NotImplementedError("mask is not supported by this Pallas kernel")
    # TODO(synk): Dropout(p=0.1) is identity in eval mode; training-mode dropout
    #             (pltpu.prng_seed + prng_random_bits per grid step) not implemented.
    # TODO(synk): pad Lk/D/Dv to multiples of 128 (with key masking) / pack two
    #             64-wide heads per call for lane-dense attn stores + full MXU width.

    if exp_in_bf16 is None:
        exp_in_bf16 = _exp_in_bf16_default()

    out_dtype = q.dtype
    mxu_dtype = jnp.bfloat16 if (cast_matmul_to_bf16 and q.dtype == jnp.float32) \
        else q.dtype

    # Fold 1/temperature into k once, in f32, before any dtype cast (one wrapper
    # op instead of a per-grid-step VPU pass; no pre-MXU rounding of the scale).
    k_scaled = (k.astype(jnp.float32) * (1.0 / float(temperature))).astype(mxu_dtype)
    q_in = q.astype(mxu_dtype)
    v_in = v.astype(mxu_dtype)

    mxu_itemsize = jnp.dtype(mxu_dtype).itemsize
    attn_itemsize = jnp.dtype(attn_dtype).itemsize
    out_itemsize = jnp.dtype(out_dtype).itemsize

    budget = _vmem_budget_bytes()
    if block_q is not None:
        assert Lq % block_q == 0
        TQ = block_q
    else:
        TQ = _pick_q_tile_attn(Lq, Lk, D, Dv, mxu_itemsize, attn_itemsize,
                               out_itemsize, budget)
    n_q_tiles = max(Lq // TQ, 1)

    # Single-buffer K/V only when it actually buys VMEM back (their block index
    # is constant along the q-tile axis).
    kv_bytes_one_copy = Lk * (D + Dv) * mxu_itemsize
    single_buffer_kv = (n_q_tiles > 1) and (kv_bytes_one_copy > (4 << 20))

    kernel = functools.partial(_sdpa_attn_kernel, exp_in_bf16=exp_in_bf16)

    out_shape = (
        jax.ShapeDtypeStruct((B, Lq, Dv), out_dtype),    # output
        jax.ShapeDtypeStruct((B, Lq, Lk), attn_dtype),   # attn (bf16 by default)
    )

    cost = pl.CostEstimate(
        flops=2 * B * Lq * Lk * (D + Dv),
        transcendentals=B * Lq * Lk,
        bytes_accessed=(
            mxu_itemsize * (B * Lq * D + B * Lk * D + B * Lk * Dv)
            + out_itemsize * B * Lq * Dv
            + attn_itemsize * B * Lq * Lk
        ),
    )

    return pl.pallas_call(
        kernel,
        out_shape=out_shape,
        grid_spec=pltpu.PrefetchScalarGridSpec(
            num_scalar_prefetch=0,
            grid=(B, n_q_tiles),
            in_specs=[
                pl.BlockSpec((1, TQ, D), lambda b, i: (b, i, 0)),
                _kv_block_spec((1, Lk, D), lambda b, i: (b, 0, 0), single_buffer_kv),
                _kv_block_spec((1, Lk, Dv), lambda b, i: (b, 0, 0), single_buffer_kv),
            ],
            out_specs=[
                pl.BlockSpec((1, TQ, Dv), lambda b, i: (b, i, 0)),
                pl.BlockSpec((1, TQ, Lk), lambda b, i: (b, i, 0)),
            ],
        ),
        compiler_params=pltpu.CompilerParams(
            # Batch axis "parallel": v7x megacore shards on batch so both TCs
            # don't duplicate K/V DMA for the same batch; q-tile axis arbitrary.
            dimension_semantics=("parallel", "arbitrary"),
            vmem_limit_bytes=budget,
        ),
        cost_estimate=cost,
    )(q_in, k_scaled, v_in)


# ---------------------------------------------------------------------------
# Kernel 2: no-attn variant (online softmax, Lk tiled) -- for callers that do
# not need the attention matrix; removes the dominant HBM writeback entirely.
# ---------------------------------------------------------------------------

def _sdpa_online_kernel(q_ref, k_ref, v_ref, out_ref, m_sc, l_sc, acc_sc, *,
                        exp_in_bf16):
    ki = pl.program_id(2)

    @pl.when(ki == 0)
    def _():
        m_sc[...] = jnp.full_like(m_sc, -jnp.inf)
        l_sc[...] = jnp.zeros_like(l_sc)
        acc_sc[...] = jnp.zeros_like(acc_sc)

    q = q_ref[0]                                   # (TQ, D)
    k = k_ref[0]                                   # (TK, D), pre-scaled by 1/T
    v = v_ref[0]                                   # (TK, Dv)

    s = lax.dot_general(
        q, k, dimension_numbers=(((1,), (1,)), ((), ())),
        preferred_element_type=jnp.float32,
    )                                              # (TQ, TK) f32

    m_prev = m_sc[...]
    m_new = jnp.maximum(m_prev, jnp.max(s, axis=-1, keepdims=True))
    alpha = jnp.exp(m_prev - m_new)
    centered = s - m_new
    if exp_in_bf16:
        p = jnp.exp(centered.astype(jnp.bfloat16)).astype(jnp.float32)
    else:
        p = jnp.exp(centered)
    l_sc[...] = alpha * l_sc[...] + jnp.sum(p, axis=-1, keepdims=True)
    acc_sc[...] = alpha * acc_sc[...] + jnp.dot(
        p.astype(v.dtype), v, preferred_element_type=jnp.float32)
    m_sc[...] = m_new

    @pl.when(ki == pl.num_programs(2) - 1)
    def _():
        l = l_sc[...]
        inv = pl.reciprocal(l, approx=True)
        inv = inv * (2.0 - l * inv)                # one Newton step
        out_ref[0] = (acc_sc[...] * inv).astype(out_ref.dtype)


def sdpa_no_attn(q, k, v, temperature, *, cast_matmul_to_bf16=False,
                 exp_in_bf16=None, block_q=None, block_k=None):
    """Same `output` as the module, but the (B, Lq, Lk) attention matrix is never
    materialized in HBM.  Lk is tiled with an online softmax, so very long Lk
    fits v7x's 64 MiB VMEM."""
    B, Lq, D = q.shape
    _, Lk, _ = k.shape
    _, _, Dv = v.shape

    if exp_in_bf16 is None:
        exp_in_bf16 = _exp_in_bf16_default()

    out_dtype = q.dtype
    mxu_dtype = jnp.bfloat16 if (cast_matmul_to_bf16 and q.dtype == jnp.float32) \
        else q.dtype

    k_scaled = (k.astype(jnp.float32) * (1.0 / float(temperature))).astype(mxu_dtype)
    q_in = q.astype(mxu_dtype)
    v_in = v.astype(mxu_dtype)

    mxu_itemsize = jnp.dtype(mxu_dtype).itemsize
    out_itemsize = jnp.dtype(out_dtype).itemsize
    budget = _vmem_budget_bytes()
    TQ, TK = _pick_flash_tiles(Lq, Lk, D, Dv, mxu_itemsize, out_itemsize, budget)
    if block_q is not None:
        assert Lq % block_q == 0
        TQ = block_q
    if block_k is not None:
        assert Lk % block_k == 0
        TK = block_k
    n_q = max(Lq // TQ, 1)
    n_k = max(Lk // TK, 1)

    kernel = functools.partial(_sdpa_online_kernel, exp_in_bf16=exp_in_bf16)

    cost = pl.CostEstimate(
        flops=2 * B * Lq * Lk * (D + Dv),
        transcendentals=B * Lq * Lk,
        bytes_accessed=(mxu_itemsize * (B * Lq * D + n_q * B * Lk * (D + Dv))
                        + out_itemsize * B * Lq * Dv),
    )

    return pl.pallas_call(
        kernel,
        out_shape=jax.ShapeDtypeStruct((B, Lq, Dv), out_dtype),
        grid_spec=pltpu.PrefetchScalarGridSpec(
            num_scalar_prefetch=0,
            grid=(B, n_q, n_k),
            in_specs=[
                pl.BlockSpec((1, TQ, D), lambda b, i, j: (b, i, 0)),
                pl.BlockSpec((1, TK, D), lambda b, i, j: (b, j, 0)),
                pl.BlockSpec((1, TK, Dv), lambda b, i, j: (b, j, 0)),
            ],
            out_specs=pl.BlockSpec((1, TQ, Dv), lambda b, i, j: (b, i, 0)),
            scratch_shapes=[
                pltpu.VMEM((TQ, 1), jnp.float32),    # running max
                pltpu.VMEM((TQ, 1), jnp.float32),    # running denom
                pltpu.VMEM((TQ, Dv), jnp.float32),   # running numerator
            ],
        ),
        compiler_params=pltpu.CompilerParams(
            dimension_semantics=("parallel", "arbitrary", "arbitrary"),
            vmem_limit_bytes=budget,
        ),
        cost_estimate=cost,
    )(q_in, k_scaled, v_in)


# ---------------------------------------------------------------------------
# Reference + demo.
# ---------------------------------------------------------------------------

def _reference(q, k, v, temperature):
    attn = jnp.einsum("bqd,bkd->bqk", q.astype(jnp.float32),
                      k.astype(jnp.float32)) / temperature
    attn = jax.nn.softmax(attn, axis=2)
    out = jnp.einsum("bqk,bkd->bqd", attn, v.astype(jnp.float32))
    return out, attn


if __name__ == "__main__":
    B, Lq, Lk, D, Dv = 2, 16, 32, 32, 32
    temperature = math.sqrt(D)

    key = jax.random.PRNGKey(0)
    kq, kk, kv = jax.random.split(key, 3)
    q = jax.random.normal(kq, (B, Lq, D), dtype=jnp.float32)
    k = jax.random.normal(kk, (B, Lk, D), dtype=jnp.float32)
    v = jax.random.normal(kv, (B, Lk, Dv), dtype=jnp.float32)

    # Main path (returns attn); block_q=8 exercises the q-tiled grid.
    out, attn = scaled_dot_product_attention(q, k, v, temperature, block_q=8)
    # No-attn flash variant; block_k=16 exercises the Lk-tiled online softmax.
    out_na = sdpa_no_attn(q, k, v, temperature, block_q=8, block_k=16)
    jax.block_until_ready((out, attn, out_na))

    ref_out, ref_attn = _reference(q, k, v, temperature)

    assert out.shape == (B, Lq, Dv) and attn.shape == (B, Lq, Lk)
    assert out_na.shape == (B, Lq, Dv)
    # Tolerances cover bf16 attn storage, bf16 exp on v6e/v7x, and the approx
    # reciprocal (+ Newton step) in the softmax denominator.
    assert jnp.allclose(out, ref_out, atol=2e-2, rtol=2e-2), "output mismatch"
    assert jnp.allclose(attn.astype(jnp.float32), ref_attn,
                        atol=2e-2, rtol=2e-2), "attn mismatch"
    assert jnp.allclose(out_na, ref_out, atol=5e-2, rtol=5e-2), \
        "no-attn output mismatch"

    print("KERNEL_OK")
</pallas_src>

<mosaic_0001>
module attributes {stable_mosaic.version = 11 : i64} {
  func.func @_sdpa_attn_kernel(%arg0: i32, %arg1: i32, %arg2: memref<1x8x32xf32, #tpu.memory_space<vmem>>, %arg3: memref<1x32x32xf32, #tpu.memory_space<vmem>>, %arg4: memref<1x32x32xf32, #tpu.memory_space<vmem>>, %arg5: memref<1x8x32xf32, #tpu.memory_space<vmem>>, %arg6: memref<1x8x32xbf16, #tpu.memory_space<vmem>>) attributes {dimension_semantics = [#tpu.dimension_semantics<parallel>, #tpu.dimension_semantics<arbitrary>], iteration_bounds = array<i64: 2, 2>, scalar_prefetch = 0 : i64, scratch_operands = 0 : i64, tpu.core_type = #tpu.core_type<tc>, window_params = [{transform_indices = @transform_0, window_bounds = array<i64: 1, 8, 32>}, {transform_indices = @transform_1, window_bounds = array<i64: 1, 32, 32>}, {transform_indices = @transform_2, window_bounds = array<i64: 1, 32, 32>}, {transform_indices = @transform_3, window_bounds = array<i64: 1, 8, 32>}, {transform_indices = @transform_4, window_bounds = array<i64: 1, 8, 32>}]} {
    %c0 = arith.constant 0 : index
    %c0_0 = arith.constant 0 : index
    %c0_1 = arith.constant 0 : index
    %0 = vector.load %arg2[%c0, %c0_0, %c0_1] : memref<1x8x32xf32, #tpu.memory_space<vmem>>, vector<1x8x32xf32>
    %1 = vector.shape_cast %0 : vector<1x8x32xf32> to vector<8x32xf32>
    %c0_2 = arith.constant 0 : index
    %c0_3 = arith.constant 0 : index
    %c0_4 = arith.constant 0 : index
    %2 = vector.load %arg3[%c0_2, %c0_3, %c0_4] : memref<1x32x32xf32, #tpu.memory_space<vmem>>, vector<1x32x32xf32>
    %3 = vector.shape_cast %2 : vector<1x32x32xf32> to vector<32x32xf32>
    %c0_5 = arith.constant 0 : index
    %c0_6 = arith.constant 0 : index
    %c0_7 = arith.constant 0 : index
    %4 = vector.load %arg4[%c0_5, %c0_6, %c0_7] : memref<1x32x32xf32, #tpu.memory_space<vmem>>, vector<1x32x32xf32>
    %5 = vector.shape_cast %4 : vector<1x32x32xf32> to vector<32x32xf32>
    %cst = arith.constant dense<0.000000e+00> : vector<8x32xf32>
    %6 = tpu.matmul %1, %3, %cst {dimension_numbers = #tpu.dot_dimension_numbers<[1], [1], [0], [0], [0, 0, 1, 0], [], []>} : vector<8x32xf32>, vector<32x32xf32>, vector<8x32xf32> -> vector<8x32xf32>
    %cst_8 = arith.constant dense<0xFF800000> : vector<8xf32>
    %7 = vector.multi_reduction <maximumf>, %6, %cst_8 [1] : vector<8x32xf32> to vector<8xf32>
    %8 = vector.shape_cast %7 : vector<8xf32> to vector<8x1xf32>
    %9 = vector.broadcast %8 : vector<8x1xf32> to vector<8x32xf32>
    %10 = arith.subf %6, %9 : vector<8x32xf32>
    %11 = math.exp %10 : vector<8x32xf32>
    %cst_9 = arith.constant dense<0.000000e+00> : vector<8xf32>
    %12 = vector.multi_reduction <add>, %11, %cst_9 [1] : vector<8x32xf32> to vector<8xf32>
    %13 = vector.shape_cast %12 : vector<8xf32> to vector<8x1xf32>
    %14 = tpu.reciprocal %13 {approx = true} : vector<8x1xf32> -> vector<8x1xf32>
    %15 = arith.mulf %13, %14 : vector<8x1xf32>
    %cst_10 = arith.constant 2.000000e+00 : f32
    %16 = vector.broadcast %cst_10 : f32 to vector<8x1xf32>
    %17 = arith.subf %16, %15 : vector<8x1xf32>
    %18 = arith.mulf %14, %17 : vector<8x1xf32>
    %19 = vector.broadcast %18 : vector<8x1xf32> to vector<8x32xf32>
    %20 = arith.mulf %11, %19 : vector<8x32xf32>
    %21 = arith.truncf %20 : vector<8x32xf32> to vector<8x32xbf16>
    %c0_11 = arith.constant 0 : index
    %c0_12 = arith.constant 0 : index
    %c0_13 = arith.constant 0 : index
    %22 = vector.load %arg6[%c0_11, %c0_12, %c0_13] : memref<1x8x32xbf16, #tpu.memory_space<vmem>>, vector<1x8x32xbf16>
    %23 = vector.shape_cast %22 : vector<1x8x32xbf16> to vector<8x32xbf16>
    %24 = vector.shape_cast %21 : vector<8x32xbf16> to vector<1x8x32xbf16>
    tpu.vector_store %arg6[%c0_11, %c0_12, %c0_13], %24 {strides = array<i32>} : memref<1x8x32xbf16, #tpu.memory_space<vmem>>, vector<1x8x32xbf16>,
    %cst_14 = arith.constant dense<0.000000e+00> : vector<8x32xf32>
    %25 = tpu.matmul %20, %5, %cst_14 {dimension_numbers = #tpu.dot_dimension_numbers<[1], [0], [0], [1], [0, 0, 1, 1], [], []>} : vector<8x32xf32>, vector<32x32xf32>, vector<8x32xf32> -> vector<8x32xf32>
    %c0_15 = arith.constant 0 : index
    %c0_16 = arith.constant 0 : index
    %c0_17 = arith.constant 0 : index
    %26 = vector.load %arg5[%c0_15, %c0_16, %c0_17] : memref<1x8x32xf32, #tpu.memory_space<vmem>>, vector<1x8x32xf32>
    %27 = vector.shape_cast %26 : vector<1x8x32xf32> to vector<8x32xf32>
    %28 = vector.shape_cast %25 : vector<8x32xf32> to vector<1x8x32xf32>
    tpu.vector_store %arg5[%c0_15, %c0_16, %c0_17], %28 {strides = array<i32>} : memref<1x8x32xf32, #tpu.memory_space<vmem>>, vector<1x8x32xf32>,
    return
  }
  func.func @transform_0(%arg0: i32, %arg1: i32) -> (i32, i32, i32) {
    %c0_i32 = arith.constant 0 : i32
    %c0_i32_0 = arith.constant 0 : i32
    return %arg0, %arg1, %c0_i32 : i32, i32, i32
  }
  func.func @transform_1(%arg0: i32, %arg1: i32) -> (i32, i32, i32) {
    %c0_i32 = arith.constant 0 : i32
    %c0_i32_0 = arith.constant 0 : i32
    %c0_i32_1 = arith.constant 0 : i32
    return %arg0, %c0_i32, %c0_i32_0 : i32, i32, i32
  }
  func.func @transform_2(%arg0: i32, %arg1: i32) -> (i32, i32, i32) {
    %c0_i32 = arith.constant 0 : i32
    %c0_i32_0 = arith.constant 0 : i32
    %c0_i32_1 = arith.constant 0 : i32
    return %arg0, %c0_i32, %c0_i32_0 : i32, i32, i32
  }
  func.func @transform_3(%arg0: i32, %arg1: i32) -> (i32, i32, i32) {
    %c0_i32 = arith.constant 0 : i32
    %c0_i32_0 = arith.constant 0 : i32
    return %arg0, %arg1, %c0_i32 : i32, i32, i32
  }
  func.func @transform_4(%arg0: i32, %arg1: i32) -> (i32, i32, i32) {
    %c0_i32 = arith.constant 0 : i32
    %c0_i32_0 = arith.constant 0 : i32
    return %arg0, %arg1, %c0_i32 : i32, i32, i32
  }
}

</mosaic_0001>

<llo_original>
// kernel: tpu_custom_call.1
$region0: #{tpu_custom_call.1}
  #allocation0 [shape = 'u32[]', space=smem, size = 0x4, offset = 0x4, fixed_abs, tag = 'smem constant byte address 0x4 - core index']
  #allocation1 [shape = 'u32[144,128]{1,0:T(1,128)}', space=vmem, size = 0x12000, scoped, tag = 'internal scratch']
  %s0 = inlined_call_operand.hbm [shape: f32[2,16,32], index: 0, kind: input, shape index: {}]
  %s1 = inlined_call_operand.hbm [shape: f32[2,32,32], index: 1, kind: input, shape index: {}]
  %s2 = inlined_call_operand.hbm [shape: f32[2,32,32], index: 2, kind: input, shape index: {}]
  %s3 = inlined_call_operand.hbm [shape: f32[2,16,32], index: 3, kind: output, shape index: {0}]
  %s4 = inlined_call_operand.hbm [shape: bf16[2,16,32], index: 4, kind: output, shape index: {1}]
  %5 = xla_tuple %s3, %s4
  %s6 = sld [smem:[#allocation0]]
  $region65: #{tpu_custom_call.1} parent=0
    _
  %s8 = ssub.s32 1, %s6
  %s9 = scalar_select 0, %s8, %s6
  $region1: #{tpu_custom_call.1} parent=0
    #allocation2 [shape = 'u8[8192]{0}', space=vmem, size = 0x2000, scoped, tag = 'input window, operand 0']
    #allocation3 [shape = 's32[2]{0}', space=sflag, size = 0x8, scoped, tag = 'scoped memory for tpu_custom_call.1']
    #allocation4 [shape = 's32[2]{0}', space=sflag, size = 0x8, scoped, tag = 'scoped memory for tpu_custom_call.1']
    #allocation5 [shape = 'u8[32768]{0}', space=vmem, size = 0x8000, scoped, tag = 'input window, operand 1']
    #allocation6 [shape = 's32[2]{0}', space=sflag, size = 0x8, scoped, tag = 'scoped memory for tpu_custom_call.1']
    #allocation7 [shape = 'u8[32768]{0}', space=vmem, size = 0x8000, scoped, tag = 'input window, operand 2']
    #allocation8 [shape = 'u8[8192]{0}', space=vmem, size = 0x2000, scoped, tag = 'output window, operand 0']
    #allocation9 [shape = 'u8[4096]{0}', space=vmem, size = 0x1000, scoped, tag = 'output window, operand 1']
    #allocation10 [shape = 's32[2]{0}', space=sflag, size = 0x8, scoped, tag = 'scoped memory for tpu_custom_call.1']
    %10 = vsyncpa [#allocation3], 0
    %s11 = scalar_lea.sflag [#allocation3], 1
    %12 = vsyncpa %s11, 0
    %13 = vsyncpa [#allocation6], 0
    %s14 = scalar_lea.sflag [#allocation6], 1
    %15 = vsyncpa %s14, 0
    %16 = vsyncpa [#allocation4], 0
    %s17 = scalar_lea.sflag [#allocation4], 1
    %18 = vsyncpa %s17, 0
    %19 = vsyncpa [#allocation10], 0
    %s20 = scalar_lea.sflag [#allocation10], 1
    %21 = vsyncpa %s20, 0
    loop: start=0, step=1, limit=6
    $region2: #{tpu_custom_call.1} parent=1 // loop_pre_header
      _
    $region3: #{tpu_custom_call.1} parent=1 // loop_header
      %s23 = sphi 0, %s27
      %p24 = scmp.ge.s32.totalorder %s23, 6
      %s30 = sphi 0, %s42
      %s31 = sphi 0, %s38
      %s32 = sphi 0, %s30
      %s33 = sphi 0, %s31
      %s34 = sphi 0, %s32
      %s35 = sphi 0, %s33
      %s47 = sphi 0, %s49
      %s50 = sphi 0, %s47
      %s51 = sphi 0, %s50
      %s67 = sphi 0, %s51
      %s73 = sphi 0, %s75
      %s76 = sphi 0, %s73
      %s77 = sphi 0, %s76
      %s93 = sphi 0, %s77
      %s99 = sphi 0, %s101
      %s102 = sphi 0, %s99
      %s103 = sphi 0, %s102
      %s119 = sphi 0, %s103
      %s127 = sphi 0, %s129
      %s130 = sphi 0, %s127
      %s131 = sphi 0, %s130
      %s147 = sphi 0, %s131
      %s155 = sphi 0, %s157
      %s158 = sphi 0, %s155
      %s159 = sphi 0, %s158
      %s175 = sphi 0, %s159
    $region4: #{tpu_custom_call.1} parent=1 // loop_header_branch
      %26 = sbr.rel (%p24) target = $region8
    $region5: #{tpu_custom_call.1} parent=1 // loop_body
      %s28 = ssub.s32 %s23, 1
      %s29 = ssub.s32 %s23, 2
      %s36 = sadd.s32 1, %s31
      %p37 = scmp.ge.s32.totalorder %s36, 2
      %s38 = scalar_select %p37, 0, %s36
      %s39 = sadd.s32 1, %s30
      %s40 = scalar_select %p37, %s39, %s30
      %p41 = scmp.ge.s32.totalorder %s40, 2
      %s42 = scalar_select %p41, 0, %s40
      %s43 = ssub.s32 %s30, %s42
      %s44 = ssub.s32 %s31, %s38
      %s45 = sor.u32 %s43, %s44
      %p46 = scmp.eq.s32.totalorder %s45, 0
      %s48 = sadd.s32 %s47, 1
      %s49 = scalar_select %p46, %s47, %s48
      %p52 = pneg %p46
      %p53 = scmp.eq.s32.totalorder %s23, 3
      %p54 = por %p52, %p53
      %p55 = scmp.ne.s32.totalorder %s47, %s50
      %p56 = scmp.eq.s32.totalorder %s23, 0
      %p57 = por %p55, %p56
      %p58 = scmp.ne.s32.totalorder %s47, %s50
      %p59 = scmp.eq.s32.totalorder %s28, 3
      %p60 = por %p58, %p59
      %p61 = scmp.ne.s32.totalorder %s50, %s51
      %p62 = scmp.eq.s32.totalorder %s28, 0
      %p63 = por %p61, %p62
      %p64 = scmp.ne.s32.totalorder %s50, %s51
      %p65 = scmp.eq.s32.totalorder %s29, 3
      %p66 = por %p64, %p65
      %p68 = scmp.ne.s32.totalorder %s51, %s67
      %p69 = scmp.eq.s32.totalorder %s29, 0
      %p70 = por %p68, %p69
      %s71 = ssub.s32 %s30, %s42
      %p72 = scmp.eq.s32.totalorder %s71, 0
      %s74 = sadd.s32 %s73, 1
      %s75 = scalar_select %p72, %s73, %s74
      %p78 = pneg %p72
      %p79 = scmp.eq.s32.totalorder %s23, 3
      %p80 = por %p78, %p79
      %p81 = scmp.ne.s32.totalorder %s73, %s76
      %p82 = scmp.eq.s32.totalorder %s23, 0
      %p83 = por %p81, %p82
      %p84 = scmp.ne.s32.totalorder %s73, %s76
      %p85 = scmp.eq.s32.totalorder %s28, 3
      %p86 = por %p84, %p85
      %p87 = scmp.ne.s32.totalorder %s76, %s77
      %p88 = scmp.eq.s32.totalorder %s28, 0
      %p89 = por %p87, %p88
      %p90 = scmp.ne.s32.totalorder %s76, %s77
      %p91 = scmp.eq.s32.totalorder %s29, 3
      %p92 = por %p90, %p91
      %p94 = scmp.ne.s32.totalorder %s77, %s93
      %p95 = scmp.eq.s32.totalorder %s29, 0
      %p96 = por %p94, %p95
      %s97 = ssub.s32 %s30, %s42
      %p98 = scmp.eq.s32.totalorder %s97, 0
      %s100 = sadd.s32 %s99, 1
      %s101 = scalar_select %p98, %s99, %s100
      %p104 = pneg %p98
      %p105 = scmp.eq.s32.totalorder %s23, 3
      %p106 = por %p104, %p105
      %p107 = scmp.ne.s32.totalorder %s99, %s102
      %p108 = scmp.eq.s32.totalorder %s23, 0
      %p109 = por %p107, %p108
      %p110 = scmp.ne.s32.totalorder %s99, %s102
      %p111 = scmp.eq.s32.totalorder %s28, 3
      %p112 = por %p110, %p111
      %p113 = scmp.ne.s32.totalorder %s102, %s103
      %p114 = scmp.eq.s32.totalorder %s28, 0
      %p115 = por %p113, %p114
      %p116 = scmp.ne.s32.totalorder %s102, %s103
      %p117 = scmp.eq.s32.totalorder %s29, 3
      %p118 = por %p116, %p117
      %p120 = scmp.ne.s32.totalorder %s103, %s119
      %p121 = scmp.eq.s32.totalorder %s29, 0
      %p122 = por %p120, %p121
      %s123 = ssub.s32 %s30, %s42
      %s124 = ssub.s32 %s31, %s38
      %s125 = sor.u32 %s123, %s124
      %p126 = scmp.eq.s32.totalorder %s125, 0
      %s128 = sadd.s32 %s127, 1
      %s129 = scalar_select %p126, %s127, %s128
      %p132 = pneg %p126
      %p133 = scmp.eq.s32.totalorder %s23, 3
      %p134 = por %p132, %p133
      %p135 = scmp.ne.s32.totalorder %s127, %s130
      %p136 = scmp.eq.s32.totalorder %s23, 0
      %p137 = por %p135, %p136
      %p138 = scmp.ne.s32.totalorder %s127, %s130
      %p139 = scmp.eq.s32.totalorder %s28, 3
      %p140 = por %p138, %p139
      %p141 = scmp.ne.s32.totalorder %s130, %s131
      %p142 = scmp.eq.s32.totalorder %s28, 0
      %p143 = por %p141, %p142
      %p144 = scmp.ne.s32.totalorder %s130, %s131
      %p145 = scmp.eq.s32.totalorder %s29, 3
      %p146 = por %p144, %p145
      %p148 = scmp.ne.s32.totalorder %s131, %s147
      %p149 = scmp.eq.s32.totalorder %s29, 0
      %p150 = por %p148, %p149
      %s151 = ssub.s32 %s30, %s42
      %s152 = ssub.s32 %s31, %s38
      %s153 = sor.u32 %s151, %s152
      %p154 = scmp.eq.s32.totalorder %s153, 0
      %s156 = sadd.s32 %s155, 1
      %s157 = scalar_select %p154, %s155, %s156
      %p160 = pneg %p154
      %p161 = scmp.eq.s32.totalorder %s23, 3
      %p162 = por %p160, %p161
      %p163 = scmp.ne.s32.totalorder %s155, %s158
      %p164 = scmp.eq.s32.totalorder %s23, 0
      %p165 = por %p163, %p164
      %p166 = scmp.ne.s32.totalorder %s155, %s158
      %p167 = scmp.eq.s32.totalorder %s28, 3
      %p168 = por %p166, %p167
      %p169 = scmp.ne.s32.totalorder %s158, %s159
      %p170 = scmp.eq.s32.totalorder %s28, 0
      %p171 = por %p169, %p170
      %p172 = scmp.ne.s32.totalorder %s158, %s159
      %p173 = scmp.eq.s32.totalorder %s29, 3
      %p174 = por %p172, %p173
      %p176 = scmp.ne.s32.totalorder %s159, %s175
      %p177 = scmp.eq.s32.totalorder %s29, 0
      %p178 = por %p176, %p177
      %p179 = scmp.le.s32.totalorder 1, %s23
      %p180 = scmp.lt.s32.totalorder %s23, 5
      %p181 = pnand %p179, %p180
      %p182 = pneg %p181
      // Predicated region
      $region9: #{tpu_custom_call.1} parent=5 // pred_check
        _
      $region10: #{tpu_custom_call.1} parent=5 // pred_check_branch
        %184 = sbr.rel (%p181) target = $region12
      $region11: #{tpu_custom_call.1} parent=5 // pred_region
        %s185 = ssub.s32 %s23, 1
      $region12: #{tpu_custom_call.1} parent=5 // pred_fallthru
        _
      %p186 = scmp.lt.s32.totalorder %s23, 4
      // Predicated region
      $region13: #{tpu_custom_call.1} parent=5 // pred_check
        %p187 = pneg %p186
      $region14: #{tpu_custom_call.1} parent=5 // pred_check_branch
        %189 = sbr.rel (%p187) target = $region16
      $region15: #{tpu_custom_call.1} parent=5 // pred_region
        // Predicated region
        $region17: #{tpu_custom_call.1} parent=15 // pred_check
          %p190 = pneg %p57
        $region18: #{tpu_custom_call.1} parent=15 // pred_check_branch
          %192 = sbr.rel (%p190) target = $region20
        $region19: #{tpu_custom_call.1} parent=15 // pred_region
          %s193 = sand.u32 %s47, 1
          %s194 = scalar_lea.sflag [#allocation3], %s193
          %s195 = sand.u32 %s47, 1
          %s196 = smul.addr %s195, 8
          %s197 = scalar_lea.vmem [#allocation2], %s196
          %s199 = ssub.s32 128, 128
          %200 = vsyncadd %s194, %s199
          %s201 = smul.addr %s30, 2
          %s202 = sadd.s32 %s31, %s201
          %s203 = smul.addr %s202, 128
          %s204 = scalar_lea.hbm %s0, %s203
          %s206 = sshll.u32 %s197, 4
          %s207 = int_to_ptr.vmem [resolvable:$true] %s206
          %209 = dma.hbm_to_vmem [thread:$0]  %s204, 128, %s207, %s194
        $region20: #{tpu_custom_call.1} parent=15 // pred_fallthru
          _
        // Predicated region
        $region21: #{tpu_custom_call.1} parent=15 // pred_check
          %p210 = pneg %p83
        $region22: #{tpu_custom_call.1} parent=15 // pred_check_branch
          %212 = sbr.rel (%p210) target = $region24
        $region23: #{tpu_custom_call.1} parent=15 // pred_region
          %s213 = sand.u32 %s23, 1
          %s214 = scalar_lea.sflag [#allocation6], %s213
          %s215 = sand.u32 %s73, 1
          %s216 = smul.addr %s215, 32
          %s217 = scalar_lea.vmem [#allocation5], %s216
          %s219 = ssub.s32 512, 512
          %220 = vsyncadd %s214, %s219
          %s221 = smul.addr %s30, 4
          %s222 = smul.addr %s221, 128
          %s223 = scalar_lea.hbm %s1, %s222
          %s224 = sshll.u32 %s217, 4
          %s225 = int_to_ptr.vmem [resolvable:$true] %s224
          %230 = dma.hbm_to_vmem [thread:$0]  %s223, 512, %s225, %s214, 128, 128, 8
        $region24: #{tpu_custom_call.1} parent=15 // pred_fallthru
          _
        // Predicated region
        $region25: #{tpu_custom_call.1} parent=15 // pred_check
          %p231 = pneg %p109
        $region26: #{tpu_custom_call.1} parent=15 // pred_check_branch
          %233 = sbr.rel (%p231) target = $region28
        $region27: #{tpu_custom_call.1} parent=15 // pred_region
          %s234 = sand.u32 %s23, 1
          %s235 = scalar_lea.sflag [#allocation6], %s234
          %s236 = sand.u32 %s99, 1
          %s237 = smul.addr %s236, 32
          %s238 = scalar_lea.vmem [#allocation7], %s237
          %s240 = ssub.s32 512, 512
          %241 = vsyncadd %s235, %s240
          %s242 = smul.addr %s30, 4
          %s243 = smul.addr %s242, 128
          %s244 = scalar_lea.hbm %s2, %s243
          %s245 = sshll.u32 %s238, 4
          %s246 = int_to_ptr.vmem [resolvable:$true] %s245
          %251 = dma.hbm_to_vmem [thread:$0]  %s244, 512, %s246, %s235, 128, 128, 8
        $region28: #{tpu_custom_call.1} parent=15 // pred_fallthru
          _
      $region16: #{tpu_custom_call.1} parent=5 // pred_fallthru
        _
      %p252 = scmp.le.s32.totalorder 1, %s23
      %p253 = scmp.lt.s32.totalorder %s23, 5
      %p254 = pnand %p252, %p253
      %p255 = pneg %p254
      // Predicated region
      $region29: #{tpu_custom_call.1} parent=5 // pred_check
        _
      $region30: #{tpu_custom_call.1} parent=5 // pred_check_branch
        %257 = sbr.rel (%p254) target = $region32
      $region31: #{tpu_custom_call.1} parent=5 // pred_region
        %s258 = ssub.s32 %s23, 1
        %s259 = sand.u32 %s50, 1
        %s260 = scalar_lea.sflag [#allocation3], %s259
        %s261 = sand.u32 %s50, 1
        %s262 = smul.addr %s261, 8
        %s263 = scalar_lea.vmem [#allocation2], %s262
        // Predicated region
        $region33: #{tpu_custom_call.1} parent=31 // pred_check
          %p264 = pneg %p63
        $region34: #{tpu_custom_call.1} parent=31 // pred_check_branch
          %266 = sbr.rel (%p264) target = $region36
        $region35: #{tpu_custom_call.1} parent=31 // pred_region
          %267 = dma.done %s260, 128
        $region36: #{tpu_custom_call.1} parent=31 // pred_fallthru
          _
        %s268 = sand.u32 %s28, 1
        %s269 = scalar_lea.sflag [#allocation6], %s268
        %s270 = sand.u32 %s76, 1
        %s271 = smul.addr %s270, 32
        %s272 = scalar_lea.vmem [#allocation5], %s271
        // Predicated region
        $region37: #{tpu_custom_call.1} parent=31 // pred_check
          %p273 = pneg %p89
        $region38: #{tpu_custom_call.1} parent=31 // pred_check_branch
          %275 = sbr.rel (%p273) target = $region40
        $region39: #{tpu_custom_call.1} parent=31 // pred_region
          %276 = dma.done %s269, 512
        $region40: #{tpu_custom_call.1} parent=31 // pred_fallthru
          _
        %s277 = sand.u32 %s28, 1
        %s278 = scalar_lea.sflag [#allocation6], %s277
        %s279 = sand.u32 %s102, 1
        %s280 = smul.addr %s279, 32
        %s281 = scalar_lea.vmem [#allocation7], %s280
        // Predicated region
        $region41: #{tpu_custom_call.1} parent=31 // pred_check
          %p282 = pneg %p115
        $region42: #{tpu_custom_call.1} parent=31 // pred_check_branch
          %284 = sbr.rel (%p282) target = $region44
        $region43: #{tpu_custom_call.1} parent=31 // pred_region
          %285 = dma.done %s278, 512
        $region44: #{tpu_custom_call.1} parent=31 // pred_fallthru
          _
        %s286 = sand.u32 %s50, 1
        %s287 = scalar_lea.sflag [#allocation3], %s286
        %s288 = sand.u32 %s50, 1
        %s289 = smul.addr %s288, 8
        %s290 = scalar_lea.vmem [#allocation2], %s289
        %p291 = pneg %p63
        %p292 = pneg %p60
        %s293 = sand.u32 %s28, 1
        %s294 = scalar_lea.sflag [#allocation6], %s293
        %s295 = sand.u32 %s76, 1
        %s296 = smul.addr %s295, 32
        %s297 = scalar_lea.vmem [#allocation5], %s296
        %p298 = pneg %p89
        %p299 = pneg %p86
        %s300 = sand.u32 %s28, 1
        %s301 = scalar_lea.sflag [#allocation6], %s300
        %s302 = sand.u32 %s102, 1
        %s303 = smul.addr %s302, 32
        %s304 = scalar_lea.vmem [#allocation7], %s303
        %p305 = pneg %p115
        %p306 = pneg %p112
        %p307 = pneg %p143
        %p308 = pneg %p140
        %s309 = sand.u32 %s130, 1
        %s310 = scalar_lea.sflag [#allocation4], %s309
        %s311 = sand.u32 %s130, 1
        %s312 = smul.addr %s311, 8
        %s313 = scalar_lea.vmem [#allocation8], %s312
        %p314 = pneg %p171
        %p315 = pneg %p168
        %s316 = sand.u32 %s158, 1
        %s317 = scalar_lea.sflag [#allocation10], %s316
        %s318 = sand.u32 %s158, 1
        %s319 = smul.addr %s318, 4
        %s320 = scalar_lea.vmem [#allocation9], %s319
        %v321 = vld [vmem:[%s263] sm:$0xff]
        %v322 = vld [vmem:[%s272] sm:$0xff]
        %v323 = vld [vmem:[%s272 + $0x8] sm:$0xff]
        %v324 = vld [vmem:[%s272 + $0x10] sm:$0xff]
        %v325 = vld [vmem:[%s272 + $0x18] sm:$0xff]
        %v326 = vld [vmem:[%s281] sm:$0xff]
        %v327 = vld [vmem:[%s281 + $0x8] sm:$0xff]
        %v328 = vld [vmem:[%s281 + $0x10] sm:$0xff]
        %v329 = vld [vmem:[%s281 + $0x18] sm:$0xff]
        %vm330 = vcmask 261120
        %v332 = vsel %vm330, %v321, 0
        %v335 = vsel %vm330, %v322, 0
        %v338 = vsel %vm330, %v323, 0
        %v341 = vsel %vm330, %v324, 0
        %v344 = vsel %vm330, %v325, 0
        %346 = vmatprep.subr.mxu0 0.0
        %347 = vmatpush1.xpose.msra.mxu0 %v335
        %348 = vmatprep.subr.mxu0 0.0
        %349 = vmatpush1.xpose.msra.mxu0 %v338
        %350 = vmatprep.subr.mxu0 0.0
        %351 = vmatpush1.xpose.msra.mxu0 %v341
        %352 = vmatprep.subr.mxu0 0.0
        %353 = vmatpush1.xpose.msra.mxu0 %v344
        %354 = vmatprep.subr.mxu0 0.0
        %355 = vmatpush1.xpose.msra.mxu0 0.0
        %356 = vmatprep.subr.mxu0 0.0
        %357 = vmatpush1.xpose.msra.mxu0 0.0
        %358 = vmatprep.subr.mxu0 0.0
        %359 = vmatpush1.xpose.msra.mxu0 0.0
        %360 = vmatprep.subr.mxu0 0.0
        %361 = vmatpush1.xpose.msra.mxu0 0.0
        %362 = vmatprep.subr.mxu0 0.0
        %363 = vmatpush1.xpose.msra.mxu0 0.0
        %364 = vmatprep.subr.mxu0 0.0
        %365 = vmatpush1.xpose.msra.mxu0 0.0
        %366 = vmatprep.subr.mxu0 0.0
        %367 = vmatpush1.xpose.msra.mxu0 0.0
        %368 = vmatprep.subr.mxu0 0.0
        %369 = vmatpush1.xpose.msra.mxu0 0.0
        %370 = vmatprep.subr.mxu0 0.0
        %371 = vmatpush1.xpose.msra.mxu0 0.0
        %372 = vmatprep.subr.mxu0 0.0
        %373 = vmatpush1.xpose.msra.mxu0 0.0
        %374 = vmatprep.subr.mxu0 0.0
        %375 = vmatpush1.xpose.msra.mxu0 0.0
        %376 = vmatprep.subr.mxu0 0.0
        %377 = vmatpush1.xpose.msra.mxu0 0.0
        %378 = vmatprep.subr.mxu0 0.0
        %379 = vmatpush1.xpose.msra.mxu0 0.0
        %380 = vmatprep.subr.mxu0 0.0
        %381 = vmatpush1.xpose.msra.mxu0 0.0
        %382 = vmatprep.subr.mxu0 0.0
        %383 = vmatpush1.xpose.msra.mxu0 0.0
        %384 = vmatprep.subr.mxu0 0.0
        %385 = vmatpush1.xpose.msra.mxu0 0.0
        %386 = vmatprep.subr.mxu0 0.0
        %387 = vmatpush1.xpose.msra.mxu0 0.0
        %388 = vmatprep.subr.mxu0 0.0
        %389 = vmatpush1.xpose.msra.mxu0 0.0
        %390 = vmatprep.subr.mxu0 0.0
        %391 = vmatpush1.xpose.msra.mxu0 0.0
        %392 = vmatprep.subr.mxu0 0.0
        %393 = vmatpush1.xpose.msra.mxu0 0.0
        %394 = vmatprep.subr.mxu0 0.0
        %395 = vmatpush1.xpose.msra.mxu0 0.0
        %396 = vmatprep.subr.mxu0 0.0
        %397 = vmatpush1.xpose.msra.mxu0 0.0
        %398 = vmatprep.subr.mxu0 0.0
        %399 = vmatpush1.xpose.msra.mxu0 0.0
        %400 = vmatprep.subr.mxu0 0.0
        %401 = vmatpush1.xpose.msra.mxu0 0.0
        %402 = vmatprep.subr.mxu0 0.0
        %403 = vmatpush1.xpose.msra.mxu0 0.0
        %404 = vmatprep.subr.mxu0 0.0
        %405 = vmatpush1.xpose.msra.mxu0 0.0
        %406 = vmatprep.subr.mxu0 0.0
        %407 = vmatpush1.xpose.msra.mxu0 0.0
        %408 = vmatprep.subr.mxu0 0.0
        %409 = vmatpush1.xpose.msra.mxu0 0.0
        %410 = vmatprep.mubr.f32.mxu0 0.0
        %411 = vmatmul.mubr.f32.gmra.mrb[0].mxu0 %v332
        %v412 = vpop.f32.mrb[0].mxu0
        %v413 = vadd.f32 0.0, %v412
        %v414 = vpop.f32.mrb[0].mxu0
        %415 = vdwg.mxu0
        %v416 = vsel %vm330, %v413, -inf
        %417 = vmax.xlane.f32.xlu0 %v416
        %v418 = vpop.xlane.xlu0 %417
        %v419 = vsub.f32 %v413, %v418
        %v420 = vmul.f32 %v419, 1.442695
        %v421 = vpow.pop %v420
        %v422 = vsel %vm330, %v421, 0.0
        %423 = vadd.xlane.f32.xlu0 %v422
        %v424 = vpop.xlane.xlu0 %423
        %v425 = vrcp.pop %v424
        %v426 = vmul.f32 %v424, %v425
        %v427 = vsub.f32 2.0, %v426
        %v428 = vmul.f32 %v425, %v427
        %v429 = vmul.f32 %v421, %v428
        %v430 = vpack.c.bf16 %v429, %v429
        %vm431 = vcmask 257024
        %432 = vst.msk [vmem:[%s320] sm:$0xf] %vm431, %v430
        %v434 = vsel %vm330, %v429, 0
        %436 = vmatprep.subr.mxu0 0.0
        %437 = vmatpush1.msra.mxu0 %v326
        %438 = vmatprep.subr.mxu0 0.0
        %439 = vmatpush1.msra.mxu0 %v327
        %440 = vmatprep.subr.mxu0 0.0
        %441 = vmatpush1.msra.mxu0 %v328
        %442 = vmatprep.subr.mxu0 0.0
        %443 = vmatpush1.msra.mxu0 %v329
        %444 = vmatprep.subr.mxu0 0.0
        %445 = vmatpush1.msra.mxu0 0.0
        %446 = vmatprep.subr.mxu0 0.0
        %447 = vmatpush1.msra.mxu0 0.0
        %448 = vmatprep.subr.mxu0 0.0
        %449 = vmatpush1.msra.mxu0 0.0
        %450 = vmatprep.subr.mxu0 0.0
        %451 = vmatpush1.msra.mxu0 0.0
        %452 = vmatprep.subr.mxu0 0.0
        %453 = vmatpush1.msra.mxu0 0.0
        %454 = vmatprep.subr.mxu0 0.0
        %455 = vmatpush1.msra.mxu0 0.0
        %456 = vmatprep.subr.mxu0 0.0
        %457 = vmatpush1.msra.mxu0 0.0
        %458 = vmatprep.subr.mxu0 0.0
        %459 = vmatpush1.msra.mxu0 0.0
        %460 = vmatprep.subr.mxu0 0.0
        %461 = vmatpush1.msra.mxu0 0.0
        %462 = vmatprep.subr.mxu0 0.0
        %463 = vmatpush1.msra.mxu0 0.0
        %464 = vmatprep.subr.mxu0 0.0
        %465 = vmatpush1.msra.mxu0 0.0
        %466 = vmatprep.subr.mxu0 0.0
        %467 = vmatpush1.msra.mxu0 0.0
        %468 = vmatprep.subr.mxu0 0.0
        %469 = vmatpush1.msra.mxu0 0.0
        %470 = vmatprep.subr.mxu0 0.0
        %471 = vmatpush1.msra.mxu0 0.0
        %472 = vmatprep.subr.mxu0 0.0
        %473 = vmatpush1.msra.mxu0 0.0
        %474 = vmatprep.subr.mxu0 0.0
        %475 = vmatpush1.msra.mxu0 0.0
        %476 = vmatprep.subr.mxu0 0.0
        %477 = vmatpush1.msra.mxu0 0.0
        %478 = vmatprep.subr.mxu0 0.0
        %479 = vmatpush1.msra.mxu0 0.0
        %480 = vmatprep.subr.mxu0 0.0
        %481 = vmatpush1.msra.mxu0 0.0
        %482 = vmatprep.subr.mxu0 0.0
        %483 = vmatpush1.msra.mxu0 0.0
        %484 = vmatprep.subr.mxu0 0.0
        %485 = vmatpush1.msra.mxu0 0.0
        %486 = vmatprep.subr.mxu0 0.0
        %487 = vmatpush1.msra.mxu0 0.0
        %488 = vmatprep.subr.mxu0 0.0
        %489 = vmatpush1.msra.mxu0 0.0
        %490 = vmatprep.subr.mxu0 0.0
        %491 = vmatpush1.msra.mxu0 0.0
        %492 = vmatprep.subr.mxu0 0.0
        %493 = vmatpush1.msra.mxu0 0.0
        %494 = vmatprep.subr.mxu0 0.0
        %495 = vmatpush1.msra.mxu0 0.0
        %496 = vmatprep.subr.mxu0 0.0
        %497 = vmatpush1.msra.mxu0 0.0
        %498 = vmatprep.subr.mxu0 0.0
        %499 = vmatpush1.msra.mxu0 0.0
        %500 = vmatprep.mubr.f32.mxu0 0.0
        %501 = vmatmul.mubr.f32.gmra.mrb[0].mxu0 %v434
        %v502 = vpop.f32.mrb[0].mxu0
        %v503 = vadd.f32 0.0, %v502
        %v504 = vpop.f32.mrb[0].mxu0
        %505 = vdwg.mxu0
        %506 = vst.msk [vmem:[%s313] sm:$0xff] %vm330, %v503
        %s507 = sand.u32 %s130, 1
        %s508 = scalar_lea.sflag [#allocation4], %s507
        %s509 = sand.u32 %s130, 1
        %s510 = smul.addr %s509, 8
        %s511 = scalar_lea.vmem [#allocation8], %s510
        %s512 = sand.u32 %s158, 1
        %s513 = scalar_lea.sflag [#allocation10], %s512
        %s514 = sand.u32 %s158, 1
        %s515 = smul.addr %s514, 4
        %s516 = scalar_lea.vmem [#allocation9], %s515
        // Predicated region
        $region45: #{tpu_custom_call.1} parent=31 // pred_check
          %p517 = pneg %p140
        $region46: #{tpu_custom_call.1} parent=31 // pred_check_branch
          %519 = sbr.rel (%p517) target = $region48
        $region47: #{tpu_custom_call.1} parent=31 // pred_region
          %s521 = ssub.s32 128, 128
          %522 = vsyncadd %s508, %s521
          %s523 = smul.addr %s32, 2
          %s524 = sadd.s32 %s33, %s523
          %s525 = smul.addr %s524, 128
          %s526 = scalar_lea.hbm %s3, %s525
          %s528 = sshll.u32 %s511, 4
          %s529 = int_to_ptr.vmem [resolvable:$true] %s528
          %531 = dma.vmem_to_hbm [thread:$0]  %s529, 128, %s526, %s508
        $region48: #{tpu_custom_call.1} parent=31 // pred_fallthru
          _
        // Predicated region
        $region49: #{tpu_custom_call.1} parent=31 // pred_check
          %p532 = pneg %p168
        $region50: #{tpu_custom_call.1} parent=31 // pred_check_branch
          %534 = sbr.rel (%p532) target = $region52
        $region51: #{tpu_custom_call.1} parent=31 // pred_region
          %s536 = ssub.s32 64, 64
          %537 = vsyncadd %s513, %s536
          %s538 = smul.addr %s32, 2
          %s539 = sadd.s32 %s33, %s538
          %s540 = smul.addr %s539, 64
          %s541 = scalar_lea.hbm %s4, %s540
          %s543 = sshll.u32 %s516, 4
          %s544 = int_to_ptr.vmem [resolvable:$true] %s543
          %546 = dma.vmem_to_hbm [thread:$0]  %s544, 64, %s541, %s513
        $region52: #{tpu_custom_call.1} parent=31 // pred_fallthru
          _
      $region32: #{tpu_custom_call.1} parent=5 // pred_fallthru
        _
      %p547 = scmp.le.s32.totalorder 2, %s23
      // Predicated region
      $region53: #{tpu_custom_call.1} parent=5 // pred_check
        %p548 = pneg %p547
      $region54: #{tpu_custom_call.1} parent=5 // pred_check_branch
        %550 = sbr.rel (%p548) target = $region56
      $region55: #{tpu_custom_call.1} parent=5 // pred_region
        %s551 = ssub.s32 %s23, 2
        // Predicated region
        $region57: #{tpu_custom_call.1} parent=55 // pred_check
          %p552 = pneg %p146
        $region58: #{tpu_custom_call.1} parent=55 // pred_check_branch
          %554 = sbr.rel (%p552) target = $region60
        $region59: #{tpu_custom_call.1} parent=55 // pred_region
          %s555 = sand.u32 %s131, 1
          %s556 = scalar_lea.sflag [#allocation4], %s555
          %s557 = sand.u32 %s131, 1
          %s558 = smul.addr %s557, 8
          %s559 = scalar_lea.vmem [#allocation8], %s558
          %560 = dma.done %s556, 128
        $region60: #{tpu_custom_call.1} parent=55 // pred_fallthru
          _
        // Predicated region
        $region61: #{tpu_custom_call.1} parent=55 // pred_check
          %p561 = pneg %p174
        $region62: #{tpu_custom_call.1} parent=55 // pred_check_branch
          %563 = sbr.rel (%p561) target = $region64
        $region63: #{tpu_custom_call.1} parent=55 // pred_region
          %s564 = sand.u32 %s159, 1
          %s565 = scalar_lea.sflag [#allocation10], %s564
          %s566 = sand.u32 %s159, 1
          %s567 = smul.addr %s566, 4
          %s568 = scalar_lea.vmem [#allocation9], %s567
          %569 = dma.done %s565, 64
        $region64: #{tpu_custom_call.1} parent=55 // pred_fallthru
          _
      $region56: #{tpu_custom_call.1} parent=5 // pred_fallthru
        _
    $region6: #{tpu_custom_call.1} parent=1 // loop_footer
      %s27 = sadd.s32 1, %s23
    $region7: #{tpu_custom_call.1} parent=1 // loop_footer_branch
      %22 = sbr.rel target = $region3
    $region8: #{tpu_custom_call.1} parent=1 // loop_exit
      _
    %570 = vsyncpa [#allocation3], 1
    %s571 = scalar_lea.sflag [#allocation3], 1
    %572 = vsyncpa %s571, 1
    %573 = vsyncpa [#allocation6], 1
    %s574 = scalar_lea.sflag [#allocation6], 1
    %575 = vsyncpa %s574, 1
    %576 = vsyncpa [#allocation4], 1
    %s577 = scalar_lea.sflag [#allocation4], 1
    %578 = vsyncpa %s577, 1
    %579 = vsyncpa [#allocation10], 1
    %s580 = scalar_lea.sflag [#allocation10], 1
    %581 = vsyncpa %s580, 1

</llo_original>
